<compile_context>
chip_gen: v6e
topology: v6e:2x2x1
jax: 0.10.0
libtpu: 0.0.40
codegen_flags: <defaults>
</compile_context>

<pallas_src>
from functools import partial

import jax
import jax.numpy as jnp
from jax import lax
from jax.experimental import pallas as pl
from jax.experimental.pallas import tpu as pltpu

_LANES = 128


def _iou_bce_sums_kernel(x_ref, t_ref, out_ref,
                         inter_acc, psum_acc, tsum_acc, bce_acc,
                         *, hw, blk, chunks_per_split, needs_mask, binary_targets):
    """Accumulates per-row (= per sample*channel) partial sums over HW chunks.

    x_ref / t_ref : (rblk, blk) tile of the (B*C, H*W) probability / target views.
    out_ref       : (1, rblk, 4) block -> [inter, sum_p, sum_t, bce_sum] per row.
    *_acc         : (rblk, 1) f32 accumulators, live across the chunk (j) axis.
    """
    s = pl.program_id(0)                      # hw-split index (v7x megacore)
    j = pl.program_id(2)                      # chunk index within this split

    @pl.when(j == 0)
    def _():
        inter_acc[...] = jnp.zeros_like(inter_acc)
        psum_acc[...] = jnp.zeros_like(psum_acc)
        tsum_acc[...] = jnp.zeros_like(tsum_acc)
        bce_acc[...] = jnp.zeros_like(bce_acc)

    p = x_ref[...].astype(jnp.float32)        # (rblk, blk)
    t = t_ref[...]

    if needs_mask:
        # Ragged spatial tail and/or phantom chunks: zero out-of-range lanes
        # (zeros are exactly neutral for the BCE and IoU sums below).
        chunk = s * chunks_per_split + j
        offs = chunk * blk + lax.broadcasted_iota(jnp.int32, p.shape, 1)
        valid = offs < hw
        p = jnp.where(valid, p, 0.0)
        t_nz = (t != 0) & valid
    else:
        t_nz = (t != 0)

    if binary_targets:
        # Single log per element: log(p) where t==1, log(1-p) where t==0.
        t_f = t_nz.astype(jnp.float32)
        p_sel = jnp.where(t_nz, p, 1.0 - p)
        bce_elem = -jnp.maximum(jnp.log(p_sel), -100.0)
        inter_elem = jnp.where(t_nz, p, 0.0)          # == p*t for binary t
    else:
        # Soft targets: clamped two-log BCE (algebraically the textbook form).
        t_f = t.astype(jnp.float32)
        if needs_mask:
            t_f = jnp.where(valid, t_f, 0.0)
        log_p = jnp.maximum(jnp.log(p), -100.0)
        log_1mp = jnp.maximum(jnp.log(1.0 - p), -100.0)
        bce_elem = -(log_1mp + t_f * (log_p - log_1mp))
        inter_elem = p * t_f

    # Per-row partial sums; the cross-lane reduction is XLU/VALU work that
    # hides under the EUP-bound element-wise math.
    inter_acc[...] += jnp.sum(inter_elem, axis=-1, keepdims=True)
    psum_acc[...] += jnp.sum(p, axis=-1, keepdims=True)
    tsum_acc[...] += jnp.sum(t_f, axis=-1, keepdims=True)
    bce_acc[...] += jnp.sum(bce_elem, axis=-1, keepdims=True)

    @pl.when(j == pl.num_programs(2) - 1)
    def _():
        # Fires once per (split, row-block): the lane-sparse store is negligible.
        out_ref[0] = jnp.concatenate(
            [inter_acc[...], psum_acc[...], tsum_acc[...], bce_acc[...]], axis=-1)


def iou_bce_without_logit_loss(input_scale, target_scale, *, binary_targets=None,
                               target_block_bytes=6 << 20, hw_splits=None):
    """input_scale: (B,C,H,W) probabilities (any float dtype, e.g. bf16);
    target_scale: (B,C,H,W) targets (float / int / bool).  Returns (C,) f32.

    binary_targets: single-log BCE path (exact only for {0,1} targets).
    Default: auto-enabled for integer / bool target dtypes.
    """
    b, c, h, w = input_scale.shape
    assert target_scale.shape == input_scale.shape
    hw = h * w
    bc = b * c

    if binary_targets is None:
        binary_targets = (jnp.issubdtype(target_scale.dtype, jnp.integer)
                          or jnp.issubdtype(target_scale.dtype, jnp.bool_))
    binary_targets = bool(binary_targets)

    # Free contiguous-collapse reshapes -- no extra HBM pass (no jnp.pad).
    x = input_scale.reshape(bc, hw)
    t = target_scale.reshape(bc, hw)

    # Row blocks over B*C keep the sublanes dense even for small C.
    rblk = 8 if bc >= 8 else bc               # full-extent rows when B*C < 8
    n_rblocks = pl.cdiv(bc, rblk)

    # HW chunk: as large as the byte budget allows, a multiple of 128 lanes
    # (or the full extent when everything fits in one chunk).
    item_bytes = x.dtype.itemsize + t.dtype.itemsize
    lanes_needed = pl.cdiv(hw, _LANES)
    ts_budget = max(1, target_block_bytes // (rblk * _LANES * item_bytes))
    if ts_budget >= lanes_needed:
        blk, n_chunks = hw, 1                 # single full-extent chunk
    else:
        blk = int(ts_budget) * _LANES
        n_chunks = pl.cdiv(hw, blk)

    # v7x megacore: split the chunk range when the parallel row-block count is
    # odd / 1 so both TensorCores stay busy.  No effect on single-TC v5e/v6e.
    if hw_splits is None:
        hw_splits = 2 if (n_rblocks % 2 == 1 and n_chunks >= 2) else 1
    hw_splits = max(1, min(int(hw_splits), n_chunks))
    chunks_per_split = pl.cdiv(n_chunks, hw_splits)
    needs_mask = (hw_splits * chunks_per_split * blk != hw)

    def data_index(s, i, j):
        chunk = s * chunks_per_split + j
        if hw_splits * chunks_per_split > n_chunks:    # phantom chunks possible
            chunk = jnp.minimum(chunk, n_chunks - 1)   # keep the DMA in bounds
        return (i, chunk)

    kernel = partial(_iou_bce_sums_kernel, hw=hw, blk=blk,
                     chunks_per_split=chunks_per_split,
                     needs_mask=needs_mask, binary_targets=binary_targets)

    # Double-buffered inputs (+ small out/scratch) with explicit headroom;
    # capped well below v7x's 64 MiB physical VMEM.
    vmem_limit = int(min(max(2 * target_block_bytes + (8 << 20), 16 << 20), 48 << 20))

    sums = pl.pallas_call(
        kernel,
        out_shape=jax.ShapeDtypeStruct((hw_splits, bc, 4), jnp.float32),
        grid_spec=pltpu.PrefetchScalarGridSpec(
            num_scalar_prefetch=0,
            grid=(hw_splits, n_rblocks, chunks_per_split),
            in_specs=[
                pl.BlockSpec((rblk, blk), data_index),
                pl.BlockSpec((rblk, blk), data_index),
            ],
            out_specs=pl.BlockSpec((1, rblk, 4), lambda s, i, j: (s, i, 0)),
            scratch_shapes=[pltpu.VMEM((rblk, 1), jnp.float32) for _ in range(4)],
        ),
        compiler_params=pltpu.CompilerParams(
            dimension_semantics=("parallel", "parallel", "arbitrary"),
            vmem_limit_bytes=vmem_limit),
    )(x, t)

    # Tiny final math in JAX: combine splits, IoU division, BCE mean, 1/B.
    sums = jnp.sum(sums, axis=0).reshape(b, c, 4)              # (B, C, 4)
    inter = sums[..., 0]
    psum = sums[..., 1]
    tsum = sums[..., 2]
    bce_sum = sums[..., 3]
    iou = (inter + 1.0) / (psum + tsum - inter + 1.0)          # (B, C)
    bce = jnp.sum(bce_sum, axis=1) / float(c * hw)             # (B,)
    per_sample = (1.0 - iou) + bce[:, None]                    # (B, C)
    return (jnp.sum(per_sample, axis=0) / b).astype(jnp.float32)


def _reference(input_scale, target_scale):
    # Pure-JAX reference mirroring the PyTorch loop (f32 math, clamped logs).
    p = input_scale.astype(jnp.float32)
    t = target_scale.astype(jnp.float32)
    b = p.shape[0]
    log_p = jnp.maximum(jnp.log(p), -100.0)
    log_1mp = jnp.maximum(jnp.log(1.0 - p), -100.0)
    bce = jnp.mean(-(t * log_p + (1.0 - t) * log_1mp), axis=(1, 2, 3))      # (B,)
    inter = jnp.sum(p * t, axis=(2, 3))                                     # (B, C)
    union = jnp.sum(p + t, axis=(2, 3))                                     # (B, C)
    iou = (inter + 1.0) / (union - inter + 1.0)                             # (B, C)
    per_sample = 1.0 - iou + bce[:, None]                                   # (B, C)
    return jnp.sum(per_sample, axis=0) / b                                  # (C,)


if __name__ == "__main__":
    key = jax.random.PRNGKey(0)
    k1, k2, k3, k4, k5, k6 = jax.random.split(key, 6)

    # Case 1: bf16 probabilities + int8 binary targets (single-log path),
    # hw multiple of 128, B*C == 8 -> fully dense rows, no masking.
    B, C, H, W = 2, 4, 16, 16
    p1 = jax.nn.sigmoid(jax.random.normal(k1, (B, C, H, W), jnp.float32)
                        ).astype(jnp.bfloat16)
    t1 = jax.random.bernoulli(k2, 0.5, (B, C, H, W)).astype(jnp.int8)
    out1 = jax.block_until_ready(iou_bce_without_logit_loss(p1, t1))
    ref1 = _reference(p1.astype(jnp.float32), t1.astype(jnp.float32))
    assert out1.shape == (C,)
    assert jnp.allclose(out1, ref1, rtol=1e-4, atol=1e-5), (out1, ref1)

    # Case 2: f32 inputs, float targets (exact two-log soft path), hw < 128
    # (full-extent chunk, not a multiple of 128), B*C == 9 -> partial row block.
    B2, C2, H2, W2 = 3, 3, 10, 10
    p2 = jax.nn.sigmoid(jax.random.normal(k3, (B2, C2, H2, W2), jnp.float32))
    t2 = jax.random.bernoulli(k4, 0.5, (B2, C2, H2, W2)).astype(jnp.float32)
    out2 = jax.block_until_ready(iou_bce_without_logit_loss(p2, t2))
    ref2 = _reference(p2, t2)
    assert out2.shape == (C2,)
    assert jnp.allclose(out2, ref2, rtol=1e-4, atol=1e-5), (out2, ref2)

    # Case 3: ragged spatial tail + hw-chunk split (v7x megacore path) +
    # phantom-chunk clamp, forced with a tiny block-byte budget.
    B3, C3, H3, W3 = 1, 2, 30, 30
    p3 = jax.nn.sigmoid(jax.random.normal(k5, (B3, C3, H3, W3), jnp.float32))
    t3 = jax.random.bernoulli(k6, 0.5, (B3, C3, H3, W3)).astype(jnp.int8)
    out3 = jax.block_until_ready(
        iou_bce_without_logit_loss(p3, t3, target_block_bytes=2 * _LANES * 5 * 3))
    ref3 = _reference(p3, t3.astype(jnp.float32))
    assert out3.shape == (C3,)
    assert jnp.allclose(out3, ref3, rtol=1e-4, atol=1e-5), (out3, ref3)

    print("KERNEL_OK")
</pallas_src>

<mosaic_0001>
module attributes {stable_mosaic.version = 11 : i64} {
  func.func @_iou_bce_sums_kernel(%arg0: i32, %arg1: i32, %arg2: i32, %arg3: memref<8x256xbf16, #tpu.memory_space<vmem>>, %arg4: memref<8x256xi8, #tpu.memory_space<vmem>>, %arg5: memref<1x8x4xf32, #tpu.memory_space<vmem>>, %arg6: memref<8x1xf32, #tpu.memory_space<vmem>>, %arg7: memref<8x1xf32, #tpu.memory_space<vmem>>, %arg8: memref<8x1xf32, #tpu.memory_space<vmem>>, %arg9: memref<8x1xf32, #tpu.memory_space<vmem>>) attributes {dimension_semantics = [#tpu.dimension_semantics<parallel>, #tpu.dimension_semantics<parallel>, #tpu.dimension_semantics<arbitrary>], iteration_bounds = array<i64: 1, 1, 1>, scalar_prefetch = 0 : i64, scratch_operands = 4 : i64, tpu.core_type = #tpu.core_type<tc>, window_params = [{transform_indices = @transform_0, window_bounds = array<i64: 8, 256>}, {transform_indices = @transform_1, window_bounds = array<i64: 8, 256>}, {transform_indices = @transform_2, window_bounds = array<i64: 1, 8, 4>}]} {
    %c0_i32 = arith.constant 0 : i32
    %0 = arith.cmpi eq, %arg2, %c0_i32 : i32
    %1 = arith.extui %0 : i1 to i32
    %c0_i32_0 = arith.constant 0 : i32
    %2 = arith.cmpi ne, %1, %c0_i32_0 : i32
    scf.if %2 {
      %cst_29 = arith.constant 0.000000e+00 : f32
      %43 = vector.broadcast %cst_29 : f32 to vector<8x1xf32>
      %c0_30 = arith.constant 0 : index
      %c0_31 = arith.constant 0 : index
      %44 = vector.load %arg6[%c0_30, %c0_31] : memref<8x1xf32, #tpu.memory_space<vmem>>, vector<8x1xf32>
      tpu.vector_store %arg6[%c0_30, %c0_31], %43 {strides = array<i32>} : memref<8x1xf32, #tpu.memory_space<vmem>>, vector<8x1xf32>,
      %cst_32 = arith.constant 0.000000e+00 : f32
      %45 = vector.broadcast %cst_32 : f32 to vector<8x1xf32>
      %c0_33 = arith.constant 0 : index
      %c0_34 = arith.constant 0 : index
      %46 = vector.load %arg7[%c0_33, %c0_34] : memref<8x1xf32, #tpu.memory_space<vmem>>, vector<8x1xf32>
      tpu.vector_store %arg7[%c0_33, %c0_34], %45 {strides = array<i32>} : memref<8x1xf32, #tpu.memory_space<vmem>>, vector<8x1xf32>,
      %cst_35 = arith.constant 0.000000e+00 : f32
      %47 = vector.broadcast %cst_35 : f32 to vector<8x1xf32>
      %c0_36 = arith.constant 0 : index
      %c0_37 = arith.constant 0 : index
      %48 = vector.load %arg8[%c0_36, %c0_37] : memref<8x1xf32, #tpu.memory_space<vmem>>, vector<8x1xf32>
      tpu.vector_store %arg8[%c0_36, %c0_37], %47 {strides = array<i32>} : memref<8x1xf32, #tpu.memory_space<vmem>>, vector<8x1xf32>,
      %cst_38 = arith.constant 0.000000e+00 : f32
      %49 = vector.broadcast %cst_38 : f32 to vector<8x1xf32>
      %c0_39 = arith.constant 0 : index
      %c0_40 = arith.constant 0 : index
      %50 = vector.load %arg9[%c0_39, %c0_40] : memref<8x1xf32, #tpu.memory_space<vmem>>, vector<8x1xf32>
      tpu.vector_store %arg9[%c0_39, %c0_40], %49 {strides = array<i32>} : memref<8x1xf32, #tpu.memory_space<vmem>>, vector<8x1xf32>,
    } else {
    }
    %c0 = arith.constant 0 : index
    %c0_1 = arith.constant 0 : index
    %3 = vector.load %arg3[%c0, %c0_1] : memref<8x256xbf16, #tpu.memory_space<vmem>>, vector<8x256xbf16>
    %4 = arith.extf %3 : vector<8x256xbf16> to vector<8x256xf32>
    %c0_2 = arith.constant 0 : index
    %c0_3 = arith.constant 0 : index
    %5 = vector.load %arg4[%c0_2, %c0_3] : memref<8x256xi8, #tpu.memory_space<vmem>>, vector<8x256xi8>
    %c0_i8 = arith.constant 0 : i8
    %6 = vector.broadcast %c0_i8 : i8 to vector<8x256xi8>
    %7 = arith.cmpi ne, %5, %6 : vector<8x256xi8>
    %8 = arith.extui %7 : vector<8x256xi1> to vector<8x256xi32>
    %9 = arith.sitofp %8 : vector<8x256xi32> to vector<8x256xf32>
    %cst = arith.constant 1.000000e+00 : f32
    %10 = vector.broadcast %cst : f32 to vector<8x256xf32>
    %11 = arith.subf %10, %4 : vector<8x256xf32>
    %12 = arith.select %7, %4, %11 : vector<8x256xi1>, vector<8x256xf32>
    %13 = math.log %12 : vector<8x256xf32>
    %cst_4 = arith.constant -1.000000e+02 : f32
    %14 = vector.broadcast %cst_4 : f32 to vector<8x256xf32>
    %15 = arith.maximumf %13, %14 : vector<8x256xf32>
    %cst_5 = arith.constant 0.000000e+00 : f32
    %16 = vector.broadcast %cst_5 : f32 to vector<8x256xf32>
    %17 = arith.subf %16, %15 : vector<8x256xf32>
    %cst_6 = arith.constant 0.000000e+00 : f32
    %18 = vector.broadcast %cst_6 : f32 to vector<8x256xf32>
    %19 = arith.select %7, %4, %18 : vector<8x256xi1>, vector<8x256xf32>
    %c0_7 = arith.constant 0 : index
    %c0_8 = arith.constant 0 : index
    %20 = vector.load %arg6[%c0_7, %c0_8] : memref<8x1xf32, #tpu.memory_space<vmem>>, vector<8x1xf32>
    %cst_9 = arith.constant dense<0.000000e+00> : vector<8xf32>
    %21 = vector.multi_reduction <add>, %19, %cst_9 [1] : vector<8x256xf32> to vector<8xf32>
    %22 = vector.shape_cast %21 : vector<8xf32> to vector<8x1xf32>
    %23 = arith.addf %20, %22 : vector<8x1xf32>
    %c0_10 = arith.constant 0 : index
    %c0_11 = arith.constant 0 : index
    %24 = vector.load %arg6[%c0_10, %c0_11] : memref<8x1xf32, #tpu.memory_space<vmem>>, vector<8x1xf32>
    tpu.vector_store %arg6[%c0_10, %c0_11], %23 {strides = array<i32>} : memref<8x1xf32, #tpu.memory_space<vmem>>, vector<8x1xf32>,
    %c0_12 = arith.constant 0 : index
    %c0_13 = arith.constant 0 : index
    %25 = vector.load %arg7[%c0_12, %c0_13] : memref<8x1xf32, #tpu.memory_space<vmem>>, vector<8x1xf32>
    %cst_14 = arith.constant dense<0.000000e+00> : vector<8xf32>
    %26 = vector.multi_reduction <add>, %4, %cst_14 [1] : vector<8x256xf32> to vector<8xf32>
    %27 = vector.shape_cast %26 : vector<8xf32> to vector<8x1xf32>
    %28 = arith.addf %25, %27 : vector<8x1xf32>
    %c0_15 = arith.constant 0 : index
    %c0_16 = arith.constant 0 : index
    %29 = vector.load %arg7[%c0_15, %c0_16] : memref<8x1xf32, #tpu.memory_space<vmem>>, vector<8x1xf32>
    tpu.vector_store %arg7[%c0_15, %c0_16], %28 {strides = array<i32>} : memref<8x1xf32, #tpu.memory_space<vmem>>, vector<8x1xf32>,
    %c0_17 = arith.constant 0 : index
    %c0_18 = arith.constant 0 : index
    %30 = vector.load %arg8[%c0_17, %c0_18] : memref<8x1xf32, #tpu.memory_space<vmem>>, vector<8x1xf32>
    %cst_19 = arith.constant dense<0.000000e+00> : vector<8xf32>
    %31 = vector.multi_reduction <add>, %9, %cst_19 [1] : vector<8x256xf32> to vector<8xf32>
    %32 = vector.shape_cast %31 : vector<8xf32> to vector<8x1xf32>
    %33 = arith.addf %30, %32 : vector<8x1xf32>
    %c0_20 = arith.constant 0 : index
    %c0_21 = arith.constant 0 : index
    %34 = vector.load %arg8[%c0_20, %c0_21] : memref<8x1xf32, #tpu.memory_space<vmem>>, vector<8x1xf32>
    tpu.vector_store %arg8[%c0_20, %c0_21], %33 {strides = array<i32>} : memref<8x1xf32, #tpu.memory_space<vmem>>, vector<8x1xf32>,
    %c0_22 = arith.constant 0 : index
    %c0_23 = arith.constant 0 : index
    %35 = vector.load %arg9[%c0_22, %c0_23] : memref<8x1xf32, #tpu.memory_space<vmem>>, vector<8x1xf32>
    %cst_24 = arith.constant dense<0.000000e+00> : vector<8xf32>
    %36 = vector.multi_reduction <add>, %17, %cst_24 [1] : vector<8x256xf32> to vector<8xf32>
    %37 = vector.shape_cast %36 : vector<8xf32> to vector<8x1xf32>
    %38 = arith.addf %35, %37 : vector<8x1xf32>
    %c0_25 = arith.constant 0 : index
    %c0_26 = arith.constant 0 : index
    %39 = vector.load %arg9[%c0_25, %c0_26] : memref<8x1xf32, #tpu.memory_space<vmem>>, vector<8x1xf32>
    tpu.vector_store %arg9[%c0_25, %c0_26], %38 {strides = array<i32>} : memref<8x1xf32, #tpu.memory_space<vmem>>, vector<8x1xf32>,
    %c0_i32_27 = arith.constant 0 : i32
    %40 = arith.cmpi eq, %arg2, %c0_i32_27 : i32
    %41 = arith.extui %40 : i1 to i32
    %c0_i32_28 = arith.constant 0 : i32
    %42 = arith.cmpi ne, %41, %c0_i32_28 : i32
    scf.if %42 {
      %c0_29 = arith.constant 0 : index
      %c0_30 = arith.constant 0 : index
      %43 = vector.load %arg6[%c0_29, %c0_30] : memref<8x1xf32, #tpu.memory_space<vmem>>, vector<8x1xf32>
      %c0_31 = arith.constant 0 : index
      %c0_32 = arith.constant 0 : index
      %44 = vector.load %arg7[%c0_31, %c0_32] : memref<8x1xf32, #tpu.memory_space<vmem>>, vector<8x1xf32>
      %c0_33 = arith.constant 0 : index
      %c0_34 = arith.constant 0 : index
      %45 = vector.load %arg8[%c0_33, %c0_34] : memref<8x1xf32, #tpu.memory_space<vmem>>, vector<8x1xf32>
      %c0_35 = arith.constant 0 : index
      %c0_36 = arith.constant 0 : index
      %46 = vector.load %arg9[%c0_35, %c0_36] : memref<8x1xf32, #tpu.memory_space<vmem>>, vector<8x1xf32>
      %47 = tpu.concatenate %43, %44, %45, %46 in 1 : vector<8x1xf32>, vector<8x1xf32>, vector<8x1xf32>, vector<8x1xf32> -> vector<8x4xf32>
      %c0_37 = arith.constant 0 : index
      %c0_38 = arith.constant 0 : index
      %c0_39 = arith.constant 0 : index
      %48 = vector.load %arg5[%c0_37, %c0_38, %c0_39] : memref<1x8x4xf32, #tpu.memory_space<vmem>>, vector<1x8x4xf32>
      %49 = vector.shape_cast %48 : vector<1x8x4xf32> to vector<8x4xf32>
      %50 = vector.shape_cast %47 : vector<8x4xf32> to vector<1x8x4xf32>
      tpu.vector_store %arg5[%c0_37, %c0_38, %c0_39], %50 {strides = array<i32>} : memref<1x8x4xf32, #tpu.memory_space<vmem>>, vector<1x8x4xf32>,
    } else {
    }
    return
  }
  func.func @transform_0(%arg0: i32, %arg1: i32, %arg2: i32) -> (i32, i32) {
    %c1_i32 = arith.constant 1 : i32
    %0 = arith.muli %arg0, %c1_i32 : i32
    %1 = arith.addi %0, %arg2 : i32
    %c0_i32 = arith.constant 0 : i32
    return %arg1, %1 : i32, i32
  }
  func.func @transform_1(%arg0: i32, %arg1: i32, %arg2: i32) -> (i32, i32) {
    %c1_i32 = arith.constant 1 : i32
    %0 = arith.muli %arg0, %c1_i32 : i32
    %1 = arith.addi %0, %arg2 : i32
    %c0_i32 = arith.constant 0 : i32
    return %arg1, %1 : i32, i32
  }
  func.func @transform_2(%arg0: i32, %arg1: i32, %arg2: i32) -> (i32, i32, i32) {
    %c0_i32 = arith.constant 0 : i32
    %c0_i32_0 = arith.constant 0 : i32
    return %arg0, %arg1, %c0_i32 : i32, i32, i32
  }
}

</mosaic_0001>

<llo_original>
// kernel: tpu_custom_call.1
$region0: #{tpu_custom_call.1}
  #allocation0 [shape = 'u32[]', space=smem, size = 0x4, offset = 0x4, fixed_abs, tag = 'smem constant byte address 0x4 - core index']
  #allocation1 [shape = 'u32[144,128]{1,0:T(1,128)}', space=vmem, size = 0x12000, scoped, tag = 'internal scratch']
  #allocation2 [shape = 'f32[8,1]{1,0:T(8,128)}', space=vmem, size = 0x1000, scoped, tag = 'scratch operand']
  #allocation3 [shape = 'f32[8,1]{1,0:T(8,128)}', space=vmem, size = 0x1000, scoped, tag = 'scratch operand']
  #allocation4 [shape = 'f32[8,1]{1,0:T(8,128)}', space=vmem, size = 0x1000, scoped, tag = 'scratch operand']
  #allocation5 [shape = 'f32[8,1]{1,0:T(8,128)}', space=vmem, size = 0x1000, scoped, tag = 'scratch operand']
  %s0 = inlined_call_operand.hbm [shape: bf16[8,256], index: 0, kind: input, shape index: {}]
  %s1 = inlined_call_operand.hbm [shape: s8[8,256], index: 1, kind: input, shape index: {}]
  %s2 = inlined_call_operand.vmem [shape: f32[1,8,4], index: 2, kind: output, shape index: {}]
  %s3 = sld [smem:[#allocation0]]
  $region34: #{tpu_custom_call.1} parent=0
    _
  %s5 = ssub.s32 1, %s3
  %s6 = scalar_select 0, %s5, %s3
  $region1: #{tpu_custom_call.1} parent=0
    #allocation6 [shape = 'u8[4096]{0}', space=vmem, size = 0x1000, scoped, tag = 'input window, operand 0, single buffered']
    #allocation7 [shape = 's32[1]{0}', space=sflag, size = 0x4, scoped, tag = 'scoped memory for tpu_custom_call.1']
    #allocation8 [shape = 'u8[2048]{0}', space=vmem, size = 0x800, scoped, tag = 'input window, operand 1, single buffered']
    #allocation9 [shape = 's32[1]{0}', space=sflag, size = 0x4, scoped, tag = 'scoped memory for tpu_custom_call.1']
    %7 = vsyncpa [#allocation7], 0
    %8 = vsyncpa [#allocation9], 0
    // Predicated region
    $region2: #{tpu_custom_call.1} parent=1 // pred_check
      _
    $region3: #{tpu_custom_call.1} parent=1 // pred_check_branch
      %10 = sbr.rel (0) target = $region5
    $region4: #{tpu_custom_call.1} parent=1 // pred_region
      %s11 = sadd.s32 0, 0
      %s12 = smul.u32 2, %s11
      %s14 = ssub.s32 128, 128
      %15 = vsyncadd [#allocation7], %s14
      %s16 = smul.addr %s12, 64
      %s17 = scalar_lea.hbm %s0, %s16
      %s19 = sshll.u32 [#allocation6], 4
      %s20 = int_to_ptr.vmem [resolvable:$true] %s19
      %22 = dma.hbm_to_vmem [thread:$0]  %s17, 128, %s20, [#allocation7]
    $region5: #{tpu_custom_call.1} parent=1 // pred_fallthru
      _
    // Predicated region
    $region6: #{tpu_custom_call.1} parent=1 // pred_check
      _
    $region7: #{tpu_custom_call.1} parent=1 // pred_check_branch
      %24 = sbr.rel (0) target = $region9
    $region8: #{tpu_custom_call.1} parent=1 // pred_region
      %s25 = sadd.s32 0, 0
      %s26 = smul.u32 2, %s25
      %s28 = ssub.s32 64, 64
      %29 = vsyncadd [#allocation9], %s28
      %s30 = smul.addr %s26, 32
      %s31 = scalar_lea.hbm %s1, %s30
      %s33 = sshll.u32 [#allocation8], 4
      %s34 = int_to_ptr.vmem [resolvable:$true] %s33
      %36 = dma.hbm_to_vmem [thread:$0]  %s31, 64, %s34, [#allocation9]
    $region9: #{tpu_custom_call.1} parent=1 // pred_fallthru
      _
    // Predicated region
    $region10: #{tpu_custom_call.1} parent=1 // pred_check
      _
    $region11: #{tpu_custom_call.1} parent=1 // pred_check_branch
      %38 = sbr.rel (0) target = $region13
    $region12: #{tpu_custom_call.1} parent=1 // pred_region
      %39 = dma.done [#allocation7], 128
    $region13: #{tpu_custom_call.1} parent=1 // pred_fallthru
      _
    // Predicated region
    $region14: #{tpu_custom_call.1} parent=1 // pred_check
      _
    $region15: #{tpu_custom_call.1} parent=1 // pred_check_branch
      %41 = sbr.rel (0) target = $region17
    $region16: #{tpu_custom_call.1} parent=1 // pred_region
      %42 = dma.done [#allocation9], 64
    $region17: #{tpu_custom_call.1} parent=1 // pred_fallthru
      _
    %s43 = sadd.s32 0, 0
    %s44 = smul.u32 2, %s43
    %s45 = sadd.s32 0, 0
    %s46 = smul.u32 2, %s45
    %p49 = scmp.eq.s32.totalorder 0, 0
    // Predicated region
    $region18: #{tpu_custom_call.1} parent=1 // pred_check
      %p50 = pneg %p49
    $region19: #{tpu_custom_call.1} parent=1 // pred_check_branch
      %52 = sbr.rel (%p50) target = $region21
    $region20: #{tpu_custom_call.1} parent=1 // pred_region
      %vm53 = vcmask 7168
      %54 = vst.msk [vmem:[#allocation2] sm:$0xff] %vm53, 0.0
      %55 = vst.msk [vmem:[#allocation3] sm:$0xff] %vm53, 0.0
      %56 = vst.msk [vmem:[#allocation4] sm:$0xff] %vm53, 0.0
      %57 = vst.msk [vmem:[#allocation5] sm:$0xff] %vm53, 0.0
    $region21: #{tpu_custom_call.1} parent=1 // pred_fallthru
      _
    %v58 = vld [vmem:[#allocation6] sm:$0xff]
    %v59 = vunpack.c.l.bf16 %v58
    %v60 = vunpack.c.h.bf16 %v58
    %v61 = vld [vmem:[#allocation8] sm:$0xf]
    %vm62 = vnez %v61
    %v63 = vsel %vm62, 16843009, 0
    %v64 = vunpack.c.0.s8 %v63
    %v65 = vunpack.c.1.s8 %v63
    %vm66 = vcmp.ne.s32.totalorder %v64, 0
    %vm67 = vcmp.ne.s32.totalorder %v65, 0
    %v68 = vsel %vm66, 1, 0
    %v69 = vsel %vm67, 1, 0
    %v70 = vcvt.s32.f32 %v68
    %v71 = vcvt.s32.f32 %v69
    %v72 = vsub.f32 1.0, %v59
    %v73 = vsub.f32 1.0, %v60
    %v74 = vsel %vm66, %v59, %v72
    %v75 = vsel %vm67, %v60, %v73
    %v76 = vlog2.pop %v74
    %v77 = vmul.f32 %v76, 0.6931472
    %v78 = vlog2.pop %v75
    %v79 = vmul.f32 %v78, 0.6931472
    %v80 = vmax.f32 %v77, -100.0
    %v81 = vmax.f32 %v79, -100.0
    %v82 = vsub.f32 0.0, %v80
    %v83 = vsub.f32 0.0, %v81
    %v84 = vsel %vm66, %v59, 0.0
    %v85 = vsel %vm67, %v60, 0.0
    %v86 = vld [vmem:[#allocation2] sm:$0xff]
    %v87 = vadd.f32 %v84, %v85
    %88 = vadd.xlane.f32.xlu0 %v87
    %v89 = vpop.xlane.xlu0 %88
    %v90 = vadd.f32 %v86, %v89
    %vm91 = vcmask 7168
    %92 = vst.msk [vmem:[#allocation2] sm:$0xff] %vm91, %v90
    %v93 = vld [vmem:[#allocation3] sm:$0xff]
    %v94 = vadd.f32 %v59, %v60
    %95 = vadd.xlane.f32.xlu0 %v94
    %v96 = vpop.xlane.xlu0 %95
    %v97 = vadd.f32 %v93, %v96
    %98 = vst.msk [vmem:[#allocation3] sm:$0xff] %vm91, %v97
    %v99 = vld [vmem:[#allocation4] sm:$0xff]
    %v100 = vadd.f32 %v70, %v71
    %101 = vadd.xlane.f32.xlu0 %v100
    %v102 = vpop.xlane.xlu0 %101
    %v103 = vadd.f32 %v99, %v102
    %104 = vst.msk [vmem:[#allocation4] sm:$0xff] %vm91, %v103
    %v105 = vld [vmem:[#allocation5] sm:$0xff]
    %v106 = vadd.f32 %v82, %v83
    %107 = vadd.xlane.f32.xlu0 %v106
    %v108 = vpop.xlane.xlu0 %107
    %v109 = vadd.f32 %v105, %v108
    %110 = vst.msk [vmem:[#allocation5] sm:$0xff] %vm91, %v109
    // Predicated region
    $region22: #{tpu_custom_call.1} parent=1 // pred_check
      %p111 = pneg %p49
    $region23: #{tpu_custom_call.1} parent=1 // pred_check_branch
      %113 = sbr.rel (%p111) target = $region25
    $region24: #{tpu_custom_call.1} parent=1 // pred_region
      %v114 = vld [vmem:[#allocation2] sm:$0xff]
      %v115 = vld [vmem:[#allocation3] sm:$0xff]
      %v116 = vld [vmem:[#allocation4] sm:$0xff]
      %v117 = vld [vmem:[#allocation5] sm:$0xff]
      %119 = vrot.lane.b32.xlu0 %v115, 1
      %v120 = vpop.permute.xlu0 %119
      %123 = vrot.lane.b32.xlu0 %v116, 2
      %v124 = vpop.permute.xlu0 %123
      %127 = vrot.lane.b32.xlu0 %v117, 3
      %v128 = vpop.permute.xlu0 %127
      %v130 = vsel %vm91, %v114, %v120
      %vm131 = vcmask 15360
      %v132 = vsel %vm131, %v130, %v124
      %vm133 = vcmask 23552
      %v134 = vsel %vm133, %v132, %v128
      %vm135 = vcmask 31744
      %136 = vst.msk [vmem:[%s2] sm:$0xff] %vm135, %v134
    $region25: #{tpu_custom_call.1} parent=1 // pred_fallthru
      _
    // Predicated region
    $region26: #{tpu_custom_call.1} parent=1 // pred_check
      _
    $region27: #{tpu_custom_call.1} parent=1 // pred_check_branch
      %138 = sbr.rel (0) target = $region29
    $region28: #{tpu_custom_call.1} parent=1 // pred_region
      _
    $region29: #{tpu_custom_call.1} parent=1 // pred_fallthru
      _
    // Predicated region
    $region30: #{tpu_custom_call.1} parent=1 // pred_check
      _
    $region31: #{tpu_custom_call.1} parent=1 // pred_check_branch
      %140 = sbr.rel (0) target = $region33
    $region32: #{tpu_custom_call.1} parent=1 // pred_region
      _
    $region33: #{tpu_custom_call.1} parent=1 // pred_fallthru
      _
    %141 = vsyncpa [#allocation7], 1
    %142 = vsyncpa [#allocation9], 1

</llo_original>
